<compile_context>
chip_gen: v5e
topology: v5e:2x2
jax: 0.10.0
libtpu: 0.0.40
codegen_flags: <defaults>
</compile_context>

<pallas_src>
import jax
import jax.numpy as jnp
from jax.experimental import pallas as pl
from jax.experimental.pallas import tpu as pltpu

_LN_EPS = 1e-5
_LOG2PI = float(jnp.log(2.0 * jnp.pi))


def _round_up(x, m):
    return (x + m - 1) // m * m


# ---------------------------------------------------------------------------
# Kernel: batch-on-lane layout.
#   x_ref      : [S,   BT]   state tile (batch on lanes)
#   a_ref      : [A,   BT]   action tile
#   w1         : [2H,  S ]   concat(actor_l1, critic_l1) weights ([out, in])
#   b1/g1/be1  : [2H,  1 ]   bias / LN gamma / LN beta (column vectors)
#   w2         : [2H, 2H]    block-diag(actor_l2, critic_l2)
#   b2/g2/be2  : [2H,  1 ]
#   w3         : [A+1,2H]    block-diag(actor_head, critic_head)
#   b3         : [A+1, 1 ]
#   inv2v      : [A,   1 ]   0.5 * exp(-2*log_std)      (precomputed)
#   lpc        : [1,   1 ]   -sum(log_std) - 0.5*A*log(2*pi)  (precomputed)
#   out_ref    : [2,  BT]    row 0 = logprob, row 1 = state value
# ---------------------------------------------------------------------------
def actor_critic_kernel(x_ref, a_ref,
                        w1, b1, g1, be1,
                        w2, b2, g2, be2,
                        w3, b3,
                        inv2v, lpc,
                        out_ref):
    H = w1.shape[0] // 2          # n_latent_var
    A = inv2v.shape[0]            # action_dim

    def ln_tanh_pair(h, g, be):
        # per-network LayerNorm over the feature (sublane) axis, then affine+tanh
        def _ln(hh):
            mu = jnp.mean(hh, axis=0, keepdims=True)
            var = jnp.mean((hh - mu) ** 2, axis=0, keepdims=True)
            return (hh - mu) * jax.lax.rsqrt(var + _LN_EPS)

        hn = jnp.concatenate([_ln(h[:H, :]), _ln(h[H:, :])], axis=0)
        return jnp.tanh(hn * g[...] + be[...])

    x = x_ref[...]                                                    # [S, BT]

    h = jnp.dot(w1[...], x, preferred_element_type=jnp.float32) + b1[...]
    h = ln_tanh_pair(h, g1, be1)                                      # [2H, BT]
    h = jnp.dot(w2[...], h, preferred_element_type=jnp.float32) + b2[...]
    h = ln_tanh_pair(h, g2, be2)                                      # [2H, BT]
    o = jnp.dot(w3[...], h, preferred_element_type=jnp.float32) + b3[...]  # [A+1, BT]

    action_mean = jnp.tanh(o[:A, :])                                  # [A, BT]
    state_value = o[A:A + 1, :]                                       # [1, BT]

    diff = a_ref[...] - action_mean
    logp = lpc[...] - jnp.sum(diff * diff * inv2v[...], axis=0, keepdims=True)

    out_ref[0:1, :] = logp
    out_ref[1:2, :] = state_value


# ---------------------------------------------------------------------------
# Wrapper: fuses/transposes params, pads+transposes the batch, builds the grid.
# ---------------------------------------------------------------------------
def actor_critic_evaluate(state, action, params, b_tile=1024):
    """Pallas-backed ActorCritic.evaluate(state, action) (continuous case).

    Returns (action_logprobs [B], state_value [B], dist_entropy [B]).
    """
    assert b_tile % 128 == 0
    B, S = state.shape
    A = action.shape[1]

    aw1, ab1, ag1, abe1, aw2, ab2, ag2, abe2, aw3, ab3 = params["actor"]
    vw1, vb1, vg1, vbe1, vw2, vb2, vg2, vbe2, vw3, vb3 = params["critic"]
    H = aw1.shape[1]

    # --- fuse actor+critic into one network (weights in [out, in] layout) ---
    w1 = jnp.concatenate([aw1.T, vw1.T], axis=0)                    # [2H, S]
    b1 = jnp.concatenate([ab1, vb1], axis=1).T                      # [2H, 1]
    g1 = jnp.concatenate([ag1, vg1], axis=1).T
    be1 = jnp.concatenate([abe1, vbe1], axis=1).T

    zhh = jnp.zeros((H, H), jnp.float32)
    w2 = jnp.block([[aw2.T, zhh], [zhh, vw2.T]])                    # [2H, 2H]
    b2 = jnp.concatenate([ab2, vb2], axis=1).T
    g2 = jnp.concatenate([ag2, vg2], axis=1).T
    be2 = jnp.concatenate([abe2, vbe2], axis=1).T

    w3 = jnp.block([[aw3.T, jnp.zeros((A, H), jnp.float32)],
                    [jnp.zeros((1, H), jnp.float32), vw3.T]])       # [A+1, 2H]
    b3 = jnp.concatenate([ab3, vb3], axis=1).T                      # [A+1, 1]

    # --- batch-invariant distribution constants (hoisted out of the kernel) ---
    log_std = params["log_std"]                                     # [1, A]
    inv2v = (0.5 * jnp.exp(-2.0 * log_std)).T                       # [A, 1]
    lp_const = (-jnp.sum(log_std) - 0.5 * A * _LOG2PI).reshape(1, 1)
    ent_const = jnp.sum(0.5 + 0.5 * _LOG2PI + log_std)              # scalar

    # --- pad + transpose inputs to batch-on-lane layout ---
    bt = min(b_tile, _round_up(B, 128))
    B_pad = _round_up(B, bt)
    state_t = jnp.zeros((S, B_pad), jnp.float32).at[:, :B].set(state.T)
    action_t = jnp.zeros((A, B_pad), jnp.float32).at[:, :B].set(action.T)

    consts = [w1, b1, g1, be1, w2, b2, g2, be2, w3, b3, inv2v, lp_const]

    out = pl.pallas_call(
        actor_critic_kernel,
        out_shape=jax.ShapeDtypeStruct((2, B_pad), jnp.float32),
        grid=(B_pad // bt,),
        in_specs=[
            pl.BlockSpec((S, bt), lambda i: (0, i)),     # state tile
            pl.BlockSpec((A, bt), lambda i: (0, i)),     # action tile
        ] + [pl.BlockSpec(c.shape, lambda i: (0, 0)) for c in consts],
        out_specs=pl.BlockSpec((2, bt), lambda i: (0, i)),
        compiler_params=pltpu.CompilerParams(
            dimension_semantics=("parallel",),
            vmem_limit_bytes=32 * 1024 * 1024,
        ),
    )(state_t, action_t, *consts)

    logp = out[0, :B]
    value = out[1, :B]
    ent = jnp.full((B,), ent_const, dtype=jnp.float32)
    return logp, value, ent


# ---------------------------------------------------------------------------
# deterministic parameter construction (synthetic init, no checkpoint load)
# params are stored in the "natural" [in, out] layout; the wrapper fuses them.
# ---------------------------------------------------------------------------
def make_params(key, state_dim, action_dim, n_latent_var):
    ks = jax.random.split(key, 6)

    def lin(k, din, dout, scale=0.1):
        kw, kb = jax.random.split(k)
        w = scale * jax.random.normal(kw, (din, dout), jnp.float32)
        b = scale * jax.random.normal(kb, (1, dout), jnp.float32)
        return w, b

    def block(k, din, dout):
        kl, kg, kb = jax.random.split(k, 3)
        w, b = lin(kl, din, dout)
        # randomize LN affine slightly so the gamma/beta path is exercised
        gamma = 1.0 + 0.1 * jax.random.normal(kg, (1, dout), jnp.float32)
        beta = 0.1 * jax.random.normal(kb, (1, dout), jnp.float32)
        return [w, b, gamma, beta]

    actor = (
        block(ks[0], state_dim, n_latent_var)
        + block(ks[1], n_latent_var, n_latent_var)
        + list(lin(ks[2], n_latent_var, action_dim))
    )
    critic = (
        block(ks[3], state_dim, n_latent_var)
        + block(ks[4], n_latent_var, n_latent_var)
        + list(lin(ks[5], n_latent_var, 1))
    )
    log_std = jnp.zeros((1, action_dim), jnp.float32)   # nn.Parameter(torch.zeros(action_dim))
    return {"actor": actor, "critic": critic, "log_std": log_std}


# pure-JAX reference (batch-major, un-fused) for correctness checks
def _reference_evaluate(state, action, params):
    def ln_tanh(x, w, b, g, be):
        h = x @ w + b
        mu = h.mean(-1, keepdims=True)
        var = ((h - mu) ** 2).mean(-1, keepdims=True)
        return jnp.tanh((h - mu) / jnp.sqrt(var + _LN_EPS) * g + be)

    aw1, ab1, ag1, abe1, aw2, ab2, ag2, abe2, aw3, ab3 = params["actor"]
    vw1, vb1, vg1, vbe1, vw2, vb2, vg2, vbe2, vw3, vb3 = params["critic"]
    h = ln_tanh(state, aw1, ab1, ag1, abe1)
    h = ln_tanh(h, aw2, ab2, ag2, abe2)
    mean = jnp.tanh(h @ aw3 + ab3)
    v = ln_tanh(state, vw1, vb1, vg1, vbe1)
    v = ln_tanh(v, vw2, vb2, vg2, vbe2)
    value = v @ vw3 + vb3
    log_std = params["log_std"]
    std = jnp.exp(log_std)
    logp = (-((action - mean) ** 2) / (2 * std * std) - log_std - 0.5 * _LOG2PI).sum(-1)
    ent = jnp.broadcast_to(0.5 + 0.5 * _LOG2PI + log_std, action.shape).sum(-1)
    return logp, value[:, 0], ent


if __name__ == "__main__":
    B, STATE_DIM, ACTION_DIM, N_LATENT = 8, 16, 8, 32

    key = jax.random.PRNGKey(0)
    k_state, k_action, k_params, k_state2, k_action2 = jax.random.split(key, 5)

    state = jax.random.normal(k_state, (B, STATE_DIM), jnp.float32)
    action = jax.random.normal(k_action, (B, ACTION_DIM), jnp.float32)
    params = make_params(k_params, STATE_DIM, ACTION_DIM, N_LATENT)

    # small single-tile case
    logp, value, ent = actor_critic_evaluate(state, action, params)
    jax.block_until_ready((logp, value, ent))
    ref_logp, ref_value, ref_ent = _reference_evaluate(state, action, params)
    assert jnp.allclose(logp, ref_logp, atol=1e-4, rtol=1e-4)
    assert jnp.allclose(value, ref_value, atol=1e-4, rtol=1e-4)
    assert jnp.allclose(ent, ref_ent, atol=1e-4, rtol=1e-4)

    # multi-tile case with padded tail (grid = 3, B_TILE = 128, B = 300)
    B2 = 300
    state2 = jax.random.normal(k_state2, (B2, STATE_DIM), jnp.float32)
    action2 = jax.random.normal(k_action2, (B2, ACTION_DIM), jnp.float32)
    logp2, value2, ent2 = actor_critic_evaluate(state2, action2, params, b_tile=128)
    jax.block_until_ready((logp2, value2, ent2))
    r_logp2, r_value2, r_ent2 = _reference_evaluate(state2, action2, params)
    assert jnp.allclose(logp2, r_logp2, atol=1e-4, rtol=1e-4)
    assert jnp.allclose(value2, r_value2, atol=1e-4, rtol=1e-4)
    assert jnp.allclose(ent2, r_ent2, atol=1e-4, rtol=1e-4)

    print("KERNEL_OK")
</pallas_src>

<mosaic_0001>
module attributes {stable_mosaic.version = 11 : i64} {
  func.func @actor_critic_kernel(%arg0: i32, %arg1: memref<16x128xf32, #tpu.memory_space<vmem>>, %arg2: memref<8x128xf32, #tpu.memory_space<vmem>>, %arg3: memref<64x16xf32, #tpu.memory_space<vmem>>, %arg4: memref<64x1xf32, #tpu.memory_space<vmem>>, %arg5: memref<64x1xf32, #tpu.memory_space<vmem>>, %arg6: memref<64x1xf32, #tpu.memory_space<vmem>>, %arg7: memref<64x64xf32, #tpu.memory_space<vmem>>, %arg8: memref<64x1xf32, #tpu.memory_space<vmem>>, %arg9: memref<64x1xf32, #tpu.memory_space<vmem>>, %arg10: memref<64x1xf32, #tpu.memory_space<vmem>>, %arg11: memref<9x64xf32, #tpu.memory_space<vmem>>, %arg12: memref<9x1xf32, #tpu.memory_space<vmem>>, %arg13: memref<8x1xf32, #tpu.memory_space<vmem>>, %arg14: memref<1x1xf32, #tpu.memory_space<vmem>>, %arg15: memref<2x128xf32, #tpu.memory_space<vmem>>) attributes {dimension_semantics = [#tpu.dimension_semantics<parallel>], iteration_bounds = array<i64: 1>, scalar_prefetch = 0 : i64, scratch_operands = 0 : i64, tpu.core_type = #tpu.core_type<tc>, window_params = [{transform_indices = @transform_0, window_bounds = array<i64: 16, 128>}, {transform_indices = @transform_1, window_bounds = array<i64: 8, 128>}, {pipeline_mode = #tpu.pipeline_mode<synchronous>, transform_indices = @transform_2, window_bounds = array<i64: 64, 16>}, {pipeline_mode = #tpu.pipeline_mode<synchronous>, transform_indices = @transform_3, window_bounds = array<i64: 64, 1>}, {pipeline_mode = #tpu.pipeline_mode<synchronous>, transform_indices = @transform_4, window_bounds = array<i64: 64, 1>}, {pipeline_mode = #tpu.pipeline_mode<synchronous>, transform_indices = @transform_5, window_bounds = array<i64: 64, 1>}, {pipeline_mode = #tpu.pipeline_mode<synchronous>, transform_indices = @transform_6, window_bounds = array<i64: 64, 64>}, {pipeline_mode = #tpu.pipeline_mode<synchronous>, transform_indices = @transform_7, window_bounds = array<i64: 64, 1>}, {pipeline_mode = #tpu.pipeline_mode<synchronous>, transform_indices = @transform_8, window_bounds = array<i64: 64, 1>}, {pipeline_mode = #tpu.pipeline_mode<synchronous>, transform_indices = @transform_9, window_bounds = array<i64: 64, 1>}, {pipeline_mode = #tpu.pipeline_mode<synchronous>, transform_indices = @transform_10, window_bounds = array<i64: 9, 64>}, {pipeline_mode = #tpu.pipeline_mode<synchronous>, transform_indices = @transform_11, window_bounds = array<i64: 9, 1>}, {pipeline_mode = #tpu.pipeline_mode<synchronous>, transform_indices = @transform_12, window_bounds = array<i64: 8, 1>}, {pipeline_mode = #tpu.pipeline_mode<synchronous>, transform_indices = @transform_13, window_bounds = array<i64: 1, 1>}, {transform_indices = @transform_14, window_bounds = array<i64: 2, 128>}]} {
    %c0 = arith.constant 0 : index
    %c0_0 = arith.constant 0 : index
    %0 = vector.load %arg1[%c0, %c0_0] : memref<16x128xf32, #tpu.memory_space<vmem>>, vector<16x128xf32>
    %c0_1 = arith.constant 0 : index
    %c0_2 = arith.constant 0 : index
    %1 = vector.load %arg3[%c0_1, %c0_2] : memref<64x16xf32, #tpu.memory_space<vmem>>, vector<64x16xf32>
    %cst = arith.constant dense<0.000000e+00> : vector<64x128xf32>
    %2 = tpu.matmul %1, %0, %cst {dimension_numbers = #tpu.dot_dimension_numbers<[1], [0], [0], [1], [0, 0, 1, 1], [], []>} : vector<64x16xf32>, vector<16x128xf32>, vector<64x128xf32> -> vector<64x128xf32>
    %c0_3 = arith.constant 0 : index
    %c0_4 = arith.constant 0 : index
    %3 = vector.load %arg4[%c0_3, %c0_4] : memref<64x1xf32, #tpu.memory_space<vmem>>, vector<64x1xf32>
    %4 = vector.broadcast %3 : vector<64x1xf32> to vector<64x128xf32>
    %5 = arith.addf %2, %4 : vector<64x128xf32>
    %6 = vector.extract_strided_slice %5 {offsets = [0, 0], sizes = [32, 128], strides = [1, 1]} : vector<64x128xf32> to vector<32x128xf32>
    %cst_5 = arith.constant dense<0.000000e+00> : vector<128xf32>
    %7 = vector.multi_reduction <add>, %6, %cst_5 [0] : vector<32x128xf32> to vector<128xf32>
    %8 = vector.shape_cast %7 : vector<128xf32> to vector<1x128xf32>
    %cst_6 = arith.constant 3.200000e+01 : f32
    %9 = vector.broadcast %cst_6 : f32 to vector<1x128xf32>
    %10 = arith.divf %8, %9 : vector<1x128xf32>
    %11 = vector.broadcast %10 : vector<1x128xf32> to vector<32x128xf32>
    %12 = arith.subf %6, %11 : vector<32x128xf32>
    %13 = arith.mulf %12, %12 : vector<32x128xf32>
    %cst_7 = arith.constant dense<0.000000e+00> : vector<128xf32>
    %14 = vector.multi_reduction <add>, %13, %cst_7 [0] : vector<32x128xf32> to vector<128xf32>
    %15 = vector.shape_cast %14 : vector<128xf32> to vector<1x128xf32>
    %cst_8 = arith.constant 3.200000e+01 : f32
    %16 = vector.broadcast %cst_8 : f32 to vector<1x128xf32>
    %17 = arith.divf %15, %16 : vector<1x128xf32>
    %18 = vector.broadcast %10 : vector<1x128xf32> to vector<32x128xf32>
    %19 = arith.subf %6, %18 : vector<32x128xf32>
    %cst_9 = arith.constant 9.99999974E-6 : f32
    %20 = vector.broadcast %cst_9 : f32 to vector<1x128xf32>
    %21 = arith.addf %17, %20 : vector<1x128xf32>
    %22 = math.rsqrt %21 : vector<1x128xf32>
    %23 = vector.broadcast %22 : vector<1x128xf32> to vector<32x128xf32>
    %24 = arith.mulf %19, %23 : vector<32x128xf32>
    %25 = vector.extract_strided_slice %5 {offsets = [32, 0], sizes = [32, 128], strides = [1, 1]} : vector<64x128xf32> to vector<32x128xf32>
    %cst_10 = arith.constant dense<0.000000e+00> : vector<128xf32>
    %26 = vector.multi_reduction <add>, %25, %cst_10 [0] : vector<32x128xf32> to vector<128xf32>
    %27 = vector.shape_cast %26 : vector<128xf32> to vector<1x128xf32>
    %cst_11 = arith.constant 3.200000e+01 : f32
    %28 = vector.broadcast %cst_11 : f32 to vector<1x128xf32>
    %29 = arith.divf %27, %28 : vector<1x128xf32>
    %30 = vector.broadcast %29 : vector<1x128xf32> to vector<32x128xf32>
    %31 = arith.subf %25, %30 : vector<32x128xf32>
    %32 = arith.mulf %31, %31 : vector<32x128xf32>
    %cst_12 = arith.constant dense<0.000000e+00> : vector<128xf32>
    %33 = vector.multi_reduction <add>, %32, %cst_12 [0] : vector<32x128xf32> to vector<128xf32>
    %34 = vector.shape_cast %33 : vector<128xf32> to vector<1x128xf32>
    %cst_13 = arith.constant 3.200000e+01 : f32
    %35 = vector.broadcast %cst_13 : f32 to vector<1x128xf32>
    %36 = arith.divf %34, %35 : vector<1x128xf32>
    %37 = vector.broadcast %29 : vector<1x128xf32> to vector<32x128xf32>
    %38 = arith.subf %25, %37 : vector<32x128xf32>
    %cst_14 = arith.constant 9.99999974E-6 : f32
    %39 = vector.broadcast %cst_14 : f32 to vector<1x128xf32>
    %40 = arith.addf %36, %39 : vector<1x128xf32>
    %41 = math.rsqrt %40 : vector<1x128xf32>
    %42 = vector.broadcast %41 : vector<1x128xf32> to vector<32x128xf32>
    %43 = arith.mulf %38, %42 : vector<32x128xf32>
    %44 = tpu.concatenate %24, %43 in 0 : vector<32x128xf32>, vector<32x128xf32> -> vector<64x128xf32>
    %c0_15 = arith.constant 0 : index
    %c0_16 = arith.constant 0 : index
    %45 = vector.load %arg5[%c0_15, %c0_16] : memref<64x1xf32, #tpu.memory_space<vmem>>, vector<64x1xf32>
    %46 = vector.broadcast %45 : vector<64x1xf32> to vector<64x128xf32>
    %47 = arith.mulf %44, %46 : vector<64x128xf32>
    %c0_17 = arith.constant 0 : index
    %c0_18 = arith.constant 0 : index
    %48 = vector.load %arg6[%c0_17, %c0_18] : memref<64x1xf32, #tpu.memory_space<vmem>>, vector<64x1xf32>
    %49 = vector.broadcast %48 : vector<64x1xf32> to vector<64x128xf32>
    %50 = arith.addf %47, %49 : vector<64x128xf32>
    %51 = math.tanh %50 : vector<64x128xf32>
    %c0_19 = arith.constant 0 : index
    %c0_20 = arith.constant 0 : index
    %52 = vector.load %arg7[%c0_19, %c0_20] : memref<64x64xf32, #tpu.memory_space<vmem>>, vector<64x64xf32>
    %cst_21 = arith.constant dense<0.000000e+00> : vector<64x128xf32>
    %53 = tpu.matmul %52, %51, %cst_21 {dimension_numbers = #tpu.dot_dimension_numbers<[1], [0], [0], [1], [0, 0, 1, 1], [], []>} : vector<64x64xf32>, vector<64x128xf32>, vector<64x128xf32> -> vector<64x128xf32>
    %c0_22 = arith.constant 0 : index
    %c0_23 = arith.constant 0 : index
    %54 = vector.load %arg8[%c0_22, %c0_23] : memref<64x1xf32, #tpu.memory_space<vmem>>, vector<64x1xf32>
    %55 = vector.broadcast %54 : vector<64x1xf32> to vector<64x128xf32>
    %56 = arith.addf %53, %55 : vector<64x128xf32>
    %57 = vector.extract_strided_slice %56 {offsets = [0, 0], sizes = [32, 128], strides = [1, 1]} : vector<64x128xf32> to vector<32x128xf32>
    %cst_24 = arith.constant dense<0.000000e+00> : vector<128xf32>
    %58 = vector.multi_reduction <add>, %57, %cst_24 [0] : vector<32x128xf32> to vector<128xf32>
    %59 = vector.shape_cast %58 : vector<128xf32> to vector<1x128xf32>
    %cst_25 = arith.constant 3.200000e+01 : f32
    %60 = vector.broadcast %cst_25 : f32 to vector<1x128xf32>
    %61 = arith.divf %59, %60 : vector<1x128xf32>
    %62 = vector.broadcast %61 : vector<1x128xf32> to vector<32x128xf32>
    %63 = arith.subf %57, %62 : vector<32x128xf32>
    %64 = arith.mulf %63, %63 : vector<32x128xf32>
    %cst_26 = arith.constant dense<0.000000e+00> : vector<128xf32>
    %65 = vector.multi_reduction <add>, %64, %cst_26 [0] : vector<32x128xf32> to vector<128xf32>
    %66 = vector.shape_cast %65 : vector<128xf32> to vector<1x128xf32>
    %cst_27 = arith.constant 3.200000e+01 : f32
    %67 = vector.broadcast %cst_27 : f32 to vector<1x128xf32>
    %68 = arith.divf %66, %67 : vector<1x128xf32>
    %69 = vector.broadcast %61 : vector<1x128xf32> to vector<32x128xf32>
    %70 = arith.subf %57, %69 : vector<32x128xf32>
    %cst_28 = arith.constant 9.99999974E-6 : f32
    %71 = vector.broadcast %cst_28 : f32 to vector<1x128xf32>
    %72 = arith.addf %68, %71 : vector<1x128xf32>
    %73 = math.rsqrt %72 : vector<1x128xf32>
    %74 = vector.broadcast %73 : vector<1x128xf32> to vector<32x128xf32>
    %75 = arith.mulf %70, %74 : vector<32x128xf32>
    %76 = vector.extract_strided_slice %56 {offsets = [32, 0], sizes = [32, 128], strides = [1, 1]} : vector<64x128xf32> to vector<32x128xf32>
    %cst_29 = arith.constant dense<0.000000e+00> : vector<128xf32>
    %77 = vector.multi_reduction <add>, %76, %cst_29 [0] : vector<32x128xf32> to vector<128xf32>
    %78 = vector.shape_cast %77 : vector<128xf32> to vector<1x128xf32>
    %cst_30 = arith.constant 3.200000e+01 : f32
    %79 = vector.broadcast %cst_30 : f32 to vector<1x128xf32>
    %80 = arith.divf %78, %79 : vector<1x128xf32>
    %81 = vector.broadcast %80 : vector<1x128xf32> to vector<32x128xf32>
    %82 = arith.subf %76, %81 : vector<32x128xf32>
    %83 = arith.mulf %82, %82 : vector<32x128xf32>
    %cst_31 = arith.constant dense<0.000000e+00> : vector<128xf32>
    %84 = vector.multi_reduction <add>, %83, %cst_31 [0] : vector<32x128xf32> to vector<128xf32>
    %85 = vector.shape_cast %84 : vector<128xf32> to vector<1x128xf32>
    %cst_32 = arith.constant 3.200000e+01 : f32
    %86 = vector.broadcast %cst_32 : f32 to vector<1x128xf32>
    %87 = arith.divf %85, %86 : vector<1x128xf32>
    %88 = vector.broadcast %80 : vector<1x128xf32> to vector<32x128xf32>
    %89 = arith.subf %76, %88 : vector<32x128xf32>
    %cst_33 = arith.constant 9.99999974E-6 : f32
    %90 = vector.broadcast %cst_33 : f32 to vector<1x128xf32>
    %91 = arith.addf %87, %90 : vector<1x128xf32>
    %92 = math.rsqrt %91 : vector<1x128xf32>
    %93 = vector.broadcast %92 : vector<1x128xf32> to vector<32x128xf32>
    %94 = arith.mulf %89, %93 : vector<32x128xf32>
    %95 = tpu.concatenate %75, %94 in 0 : vector<32x128xf32>, vector<32x128xf32> -> vector<64x128xf32>
    %c0_34 = arith.constant 0 : index
    %c0_35 = arith.constant 0 : index
    %96 = vector.load %arg9[%c0_34, %c0_35] : memref<64x1xf32, #tpu.memory_space<vmem>>, vector<64x1xf32>
    %97 = vector.broadcast %96 : vector<64x1xf32> to vector<64x128xf32>
    %98 = arith.mulf %95, %97 : vector<64x128xf32>
    %c0_36 = arith.constant 0 : index
    %c0_37 = arith.constant 0 : index
    %99 = vector.load %arg10[%c0_36, %c0_37] : memref<64x1xf32, #tpu.memory_space<vmem>>, vector<64x1xf32>
    %100 = vector.broadcast %99 : vector<64x1xf32> to vector<64x128xf32>
    %101 = arith.addf %98, %100 : vector<64x128xf32>
    %102 = math.tanh %101 : vector<64x128xf32>
    %c0_38 = arith.constant 0 : index
    %c0_39 = arith.constant 0 : index
    %103 = vector.load %arg11[%c0_38, %c0_39] : memref<9x64xf32, #tpu.memory_space<vmem>>, vector<9x64xf32>
    %cst_40 = arith.constant dense<0.000000e+00> : vector<9x128xf32>
    %104 = tpu.matmul %103, %102, %cst_40 {dimension_numbers = #tpu.dot_dimension_numbers<[1], [0], [0], [1], [0, 0, 1, 1], [], []>} : vector<9x64xf32>, vector<64x128xf32>, vector<9x128xf32> -> vector<9x128xf32>
    %c0_41 = arith.constant 0 : index
    %c0_42 = arith.constant 0 : index
    %105 = vector.load %arg12[%c0_41, %c0_42] : memref<9x1xf32, #tpu.memory_space<vmem>>, vector<9x1xf32>
    %106 = vector.broadcast %105 : vector<9x1xf32> to vector<9x128xf32>
    %107 = arith.addf %104, %106 : vector<9x128xf32>
    %108 = vector.extract_strided_slice %107 {offsets = [0, 0], sizes = [8, 128], strides = [1, 1]} : vector<9x128xf32> to vector<8x128xf32>
    %109 = math.tanh %108 : vector<8x128xf32>
    %110 = vector.extract_strided_slice %107 {offsets = [8, 0], sizes = [1, 128], strides = [1, 1]} : vector<9x128xf32> to vector<1x128xf32>
    %c0_43 = arith.constant 0 : index
    %c0_44 = arith.constant 0 : index
    %111 = vector.load %arg2[%c0_43, %c0_44] : memref<8x128xf32, #tpu.memory_space<vmem>>, vector<8x128xf32>
    %112 = arith.subf %111, %109 : vector<8x128xf32>
    %c0_45 = arith.constant 0 : index
    %c0_46 = arith.constant 0 : index
    %113 = vector.load %arg14[%c0_45, %c0_46] : memref<1x1xf32, #tpu.memory_space<vmem>>, vector<1x1xf32>
    %114 = arith.mulf %112, %112 : vector<8x128xf32>
    %c0_47 = arith.constant 0 : index
    %c0_48 = arith.constant 0 : index
    %115 = vector.load %arg13[%c0_47, %c0_48] : memref<8x1xf32, #tpu.memory_space<vmem>>, vector<8x1xf32>
    %116 = vector.broadcast %115 : vector<8x1xf32> to vector<8x128xf32>
    %117 = arith.mulf %114, %116 : vector<8x128xf32>
    %cst_49 = arith.constant dense<0.000000e+00> : vector<128xf32>
    %118 = vector.multi_reduction <add>, %117, %cst_49 [0] : vector<8x128xf32> to vector<128xf32>
    %119 = vector.shape_cast %118 : vector<128xf32> to vector<1x128xf32>
    %120 = vector.broadcast %113 : vector<1x1xf32> to vector<1x128xf32>
    %121 = arith.subf %120, %119 : vector<1x128xf32>
    %c0_50 = arith.constant 0 : index
    %c0_51 = arith.constant 0 : index
    %122 = vector.load %arg15[%c0_50, %c0_51] : memref<2x128xf32, #tpu.memory_space<vmem>>, vector<1x128xf32>
    tpu.vector_store %arg15[%c0_50, %c0_51], %121 {strides = array<i32>} : memref<2x128xf32, #tpu.memory_space<vmem>>, vector<1x128xf32>,
    %c1 = arith.constant 1 : index
    %c0_52 = arith.constant 0 : index
    %123 = vector.load %arg15[%c1, %c0_52] : memref<2x128xf32, #tpu.memory_space<vmem>>, vector<1x128xf32>
    tpu.vector_store %arg15[%c1, %c0_52], %110 {strides = array<i32>} : memref<2x128xf32, #tpu.memory_space<vmem>>, vector<1x128xf32>,
    return
  }
  func.func @transform_0(%arg0: i32) -> (i32, i32) {
    %c0_i32 = arith.constant 0 : i32
    %c0_i32_0 = arith.constant 0 : i32
    return %c0_i32, %arg0 : i32, i32
  }
  func.func @transform_1(%arg0: i32) -> (i32, i32) {
    %c0_i32 = arith.constant 0 : i32
    %c0_i32_0 = arith.constant 0 : i32
    return %c0_i32, %arg0 : i32, i32
  }
  func.func @transform_2(%arg0: i32) -> (i32, i32) {
    %c0_i32 = arith.constant 0 : i32
    %c0_i32_0 = arith.constant 0 : i32
    %c0_i32_1 = arith.constant 0 : i32
    return %c0_i32, %c0_i32_0 : i32, i32
  }
  func.func @transform_3(%arg0: i32) -> (i32, i32) {
    %c0_i32 = arith.constant 0 : i32
    %c0_i32_0 = arith.constant 0 : i32
    %c0_i32_1 = arith.constant 0 : i32
    return %c0_i32, %c0_i32_0 : i32, i32
  }
  func.func @transform_4(%arg0: i32) -> (i32, i32) {
    %c0_i32 = arith.constant 0 : i32
    %c0_i32_0 = arith.constant 0 : i32
    %c0_i32_1 = arith.constant 0 : i32
    return %c0_i32, %c0_i32_0 : i32, i32
  }
  func.func @transform_5(%arg0: i32) -> (i32, i32) {
    %c0_i32 = arith.constant 0 : i32
    %c0_i32_0 = arith.constant 0 : i32
    %c0_i32_1 = arith.constant 0 : i32
    return %c0_i32, %c0_i32_0 : i32, i32
  }
  func.func @transform_6(%arg0: i32) -> (i32, i32) {
    %c0_i32 = arith.constant 0 : i32
    %c0_i32_0 = arith.constant 0 : i32
    %c0_i32_1 = arith.constant 0 : i32
    return %c0_i32, %c0_i32_0 : i32, i32
  }
  func.func @transform_7(%arg0: i32) -> (i32, i32) {
    %c0_i32 = arith.constant 0 : i32
    %c0_i32_0 = arith.constant 0 : i32
    %c0_i32_1 = arith.constant 0 : i32
    return %c0_i32, %c0_i32_0 : i32, i32
  }
  func.func @transform_8(%arg0: i32) -> (i32, i32) {
    %c0_i32 = arith.constant 0 : i32
    %c0_i32_0 = arith.constant 0 : i32
    %c0_i32_1 = arith.constant 0 : i32
    return %c0_i32, %c0_i32_0 : i32, i32
  }
  func.func @transform_9(%arg0: i32) -> (i32, i32) {
    %c0_i32 = arith.constant 0 : i32
    %c0_i32_0 = arith.constant 0 : i32
    %c0_i32_1 = arith.constant 0 : i32
    return %c0_i32, %c0_i32_0 : i32, i32
  }
  func.func @transform_10(%arg0: i32) -> (i32, i32) {
    %c0_i32 = arith.constant 0 : i32
    %c0_i32_0 = arith.constant 0 : i32
    %c0_i32_1 = arith.constant 0 : i32
    return %c0_i32, %c0_i32_0 : i32, i32
  }
  func.func @transform_11(%arg0: i32) -> (i32, i32) {
    %c0_i32 = arith.constant 0 : i32
    %c0_i32_0 = arith.constant 0 : i32
    %c0_i32_1 = arith.constant 0 : i32
    return %c0_i32, %c0_i32_0 : i32, i32
  }
  func.func @transform_12(%arg0: i32) -> (i32, i32) {
    %c0_i32 = arith.constant 0 : i32
    %c0_i32_0 = arith.constant 0 : i32
    %c0_i32_1 = arith.constant 0 : i32
    return %c0_i32, %c0_i32_0 : i32, i32
  }
  func.func @transform_13(%arg0: i32) -> (i32, i32) {
    %c0_i32 = arith.constant 0 : i32
    %c0_i32_0 = arith.constant 0 : i32
    %c0_i32_1 = arith.constant 0 : i32
    return %c0_i32, %c0_i32_0 : i32, i32
  }
  func.func @transform_14(%arg0: i32) -> (i32, i32) {
    %c0_i32 = arith.constant 0 : i32
    %c0_i32_0 = arith.constant 0 : i32
    return %c0_i32, %arg0 : i32, i32
  }
}

</mosaic_0001>

<llo_original>
// kernel: tpu_custom_call.1
$region0: #{tpu_custom_call.1}
  #allocation0 [shape = 'u32[]', space=smem, size = 0x4, offset = 0x4, fixed_abs, tag = 'smem constant byte address 0x4 - core index']
  #allocation1 [shape = 'u32[72,128]{1,0:T(1,128)}', space=vmem, size = 0x9000, scoped, tag = 'internal scratch']
  #allocation2 [shape = 'f32[1,1]{1,0:T(1,128)S(1)}', space=vmem, size = 0x200, scoped, tag = 'scoped memory for tpu_custom_call.1']
  %s0 = inlined_call_operand.vmem [shape: f32[16,128], index: 0, kind: input, shape index: {}]
  %s1 = inlined_call_operand.vmem [shape: f32[8,128], index: 1, kind: input, shape index: {}]
  %s2 = inlined_call_operand.vmem [shape: f32[64,16], index: 2, kind: input, shape index: {}]
  %s3 = inlined_call_operand.vmem [shape: f32[64,1], index: 3, kind: input, shape index: {}]
  %s4 = inlined_call_operand.vmem [shape: f32[64,1], index: 4, kind: input, shape index: {}]
  %s5 = inlined_call_operand.vmem [shape: f32[64,1], index: 5, kind: input, shape index: {}]
  %s6 = inlined_call_operand.vmem [shape: f32[64,64], index: 6, kind: input, shape index: {}]
  %s7 = inlined_call_operand.vmem [shape: f32[64,1], index: 7, kind: input, shape index: {}]
  %s8 = inlined_call_operand.vmem [shape: f32[64,1], index: 8, kind: input, shape index: {}]
  %s9 = inlined_call_operand.vmem [shape: f32[64,1], index: 9, kind: input, shape index: {}]
  %s10 = inlined_call_operand.vmem [shape: f32[9,64], index: 10, kind: input, shape index: {}]
  %s11 = inlined_call_operand.vmem [shape: f32[9,1], index: 11, kind: input, shape index: {}]
  %s12 = inlined_call_operand.vmem [shape: f32[8,1], index: 12, kind: input, shape index: {}]
  %s13 = inlined_call_operand.<no memory space> [shape: f32[1,1], index: 13, kind: input, shape index: {}]
  %s14 = inlined_call_operand.hbm [shape: f32[2,128], index: 14, kind: output, shape index: {}]
  %s15 = sld [smem:[#allocation0]]
  $region66: #{tpu_custom_call.1} parent=0
    _
  %s17 = ssub.s32 1, %s15
  %s18 = scalar_select 0, %s17, %s15
  %v19 = vstv %s13
  %20 = vst [vmem:[#allocation2] sm:$0x1] %v19
  $region1: #{tpu_custom_call.1} parent=0
    #allocation3 [shape = 'u8[1024]{0}', space=vmem, size = 0x400, scoped, tag = 'output window, operand 0, single buffered']
    #allocation4 [shape = 's32[1]{0}', space=sflag, size = 0x4, scoped, tag = 'scoped memory for tpu_custom_call.1']
    %21 = vsyncpa [#allocation4], 0
    // Predicated region
    $region2: #{tpu_custom_call.1} parent=1 // pred_check
      _
    $region3: #{tpu_custom_call.1} parent=1 // pred_check_branch
      %23 = sbr.rel (0) target = $region5
    $region4: #{tpu_custom_call.1} parent=1 // pred_region
      _
    $region5: #{tpu_custom_call.1} parent=1 // pred_fallthru
      _
    // Predicated region
    $region6: #{tpu_custom_call.1} parent=1 // pred_check
      _
    $region7: #{tpu_custom_call.1} parent=1 // pred_check_branch
      %25 = sbr.rel (0) target = $region9
    $region8: #{tpu_custom_call.1} parent=1 // pred_region
      _
    $region9: #{tpu_custom_call.1} parent=1 // pred_fallthru
      _
    // Predicated region
    $region10: #{tpu_custom_call.1} parent=1 // pred_check
      _
    $region11: #{tpu_custom_call.1} parent=1 // pred_check_branch
      %27 = sbr.rel (0) target = $region13
    $region12: #{tpu_custom_call.1} parent=1 // pred_region
      _
    $region13: #{tpu_custom_call.1} parent=1 // pred_fallthru
      _
    // Predicated region
    $region14: #{tpu_custom_call.1} parent=1 // pred_check
      _
    $region15: #{tpu_custom_call.1} parent=1 // pred_check_branch
      %29 = sbr.rel (0) target = $region17
    $region16: #{tpu_custom_call.1} parent=1 // pred_region
      _
    $region17: #{tpu_custom_call.1} parent=1 // pred_fallthru
      _
    // Predicated region
    $region18: #{tpu_custom_call.1} parent=1 // pred_check
      _
    $region19: #{tpu_custom_call.1} parent=1 // pred_check_branch
      %31 = sbr.rel (0) target = $region21
    $region20: #{tpu_custom_call.1} parent=1 // pred_region
      _
    $region21: #{tpu_custom_call.1} parent=1 // pred_fallthru
      _
    // Predicated region
    $region22: #{tpu_custom_call.1} parent=1 // pred_check
      _
    $region23: #{tpu_custom_call.1} parent=1 // pred_check_branch
      %33 = sbr.rel (0) target = $region25
    $region24: #{tpu_custom_call.1} parent=1 // pred_region
      _
    $region25: #{tpu_custom_call.1} parent=1 // pred_fallthru
      _
    // Predicated region
    $region26: #{tpu_custom_call.1} parent=1 // pred_check
      _
    $region27: #{tpu_custom_call.1} parent=1 // pred_check_branch
      %35 = sbr.rel (0) target = $region29
    $region28: #{tpu_custom_call.1} parent=1 // pred_region
      _
    $region29: #{tpu_custom_call.1} parent=1 // pred_fallthru
      _
    // Predicated region
    $region30: #{tpu_custom_call.1} parent=1 // pred_check
      _
    $region31: #{tpu_custom_call.1} parent=1 // pred_check_branch
      %37 = sbr.rel (0) target = $region33
    $region32: #{tpu_custom_call.1} parent=1 // pred_region
      _
    $region33: #{tpu_custom_call.1} parent=1 // pred_fallthru
      _
    // Predicated region
    $region34: #{tpu_custom_call.1} parent=1 // pred_check
      _
    $region35: #{tpu_custom_call.1} parent=1 // pred_check_branch
      %39 = sbr.rel (0) target = $region37
    $region36: #{tpu_custom_call.1} parent=1 // pred_region
      _
    $region37: #{tpu_custom_call.1} parent=1 // pred_fallthru
      _
    // Predicated region
    $region38: #{tpu_custom_call.1} parent=1 // pred_check
      _
    $region39: #{tpu_custom_call.1} parent=1 // pred_check_branch
      %41 = sbr.rel (0) target = $region41
    $region40: #{tpu_custom_call.1} parent=1 // pred_region
      _
    $region41: #{tpu_custom_call.1} parent=1 // pred_fallthru
      _
    // Predicated region
    $region42: #{tpu_custom_call.1} parent=1 // pred_check
      _
    $region43: #{tpu_custom_call.1} parent=1 // pred_check_branch
      %43 = sbr.rel (0) target = $region45
    $region44: #{tpu_custom_call.1} parent=1 // pred_region
      _
    $region45: #{tpu_custom_call.1} parent=1 // pred_fallthru
      _
    // Predicated region
    $region46: #{tpu_custom_call.1} parent=1 // pred_check
      _
    $region47: #{tpu_custom_call.1} parent=1 // pred_check_branch
      %45 = sbr.rel (0) target = $region49
    $region48: #{tpu_custom_call.1} parent=1 // pred_region
      _
    $region49: #{tpu_custom_call.1} parent=1 // pred_fallthru
      _
    // Predicated region
    $region50: #{tpu_custom_call.1} parent=1 // pred_check
      _
    $region51: #{tpu_custom_call.1} parent=1 // pred_check_branch
      %47 = sbr.rel (0) target = $region53
    $region52: #{tpu_custom_call.1} parent=1 // pred_region
      _
    $region53: #{tpu_custom_call.1} parent=1 // pred_fallthru
      _
    // Predicated region
    $region54: #{tpu_custom_call.1} parent=1 // pred_check
      _
    $region55: #{tpu_custom_call.1} parent=1 // pred_check_branch
      %49 = sbr.rel (0) target = $region57
    $region56: #{tpu_custom_call.1} parent=1 // pred_region
      _
    $region57: #{tpu_custom_call.1} parent=1 // pred_fallthru
      _
    %v50 = vld [vmem:[%s0] sm:$0xff]
    %v51 = vld [vmem:[%s0 + $0x8] sm:$0xff]
    %v52 = vld [vmem:[%s2] sm:$0xff]
    %v53 = vld [vmem:[%s2 + $0x8] sm:$0xff]
    %v54 = vld [vmem:[%s2 + $0x10] sm:$0xff]
    %v55 = vld [vmem:[%s2 + $0x18] sm:$0xff]
    %v56 = vld [vmem:[%s2 + $0x20] sm:$0xff]
    %v57 = vld [vmem:[%s2 + $0x28] sm:$0xff]
    %v58 = vld [vmem:[%s2 + $0x30] sm:$0xff]
    %v59 = vld [vmem:[%s2 + $0x38] sm:$0xff]
    %v60 = vld [vmem:[%s3] sm:$0xff]
    %v61 = vld [vmem:[%s3 + $0x8] sm:$0xff]
    %v62 = vld [vmem:[%s3 + $0x10] sm:$0xff]
    %v63 = vld [vmem:[%s3 + $0x18] sm:$0xff]
    %v64 = vld [vmem:[%s3 + $0x20] sm:$0xff]
    %v65 = vld [vmem:[%s3 + $0x28] sm:$0xff]
    %v66 = vld [vmem:[%s3 + $0x30] sm:$0xff]
    %v67 = vld [vmem:[%s3 + $0x38] sm:$0xff]
    %69 = vset.pattern.permute.xlu0 0
    %70 = vperm.xlu0 %69, %v60
    %v71 = vpop.permute.xlu0 %70
    %74 = vset.pattern.permute.xlu0 0
    %75 = vperm.xlu0 %74, %v61
    %v76 = vpop.permute.xlu0 %75
    %79 = vset.pattern.permute.xlu0 0
    %80 = vperm.xlu0 %79, %v62
    %v81 = vpop.permute.xlu0 %80
    %84 = vset.pattern.permute.xlu0 0
    %85 = vperm.xlu0 %84, %v63
    %v86 = vpop.permute.xlu0 %85
    %89 = vset.pattern.permute.xlu0 0
    %90 = vperm.xlu0 %89, %v64
    %v91 = vpop.permute.xlu0 %90
    %94 = vset.pattern.permute.xlu0 0
    %95 = vperm.xlu0 %94, %v65
    %v96 = vpop.permute.xlu0 %95
    %99 = vset.pattern.permute.xlu0 0
    %100 = vperm.xlu0 %99, %v66
    %v101 = vpop.permute.xlu0 %100
    %104 = vset.pattern.permute.xlu0 0
    %105 = vperm.xlu0 %104, %v67
    %v106 = vpop.permute.xlu0 %105
    %vm108 = vcmask 130048
    %v110 = vsel %vm108, %v52, 0
    %v113 = vsel %vm108, %v53, 0
    %v116 = vsel %vm108, %v54, 0
    %v119 = vsel %vm108, %v55, 0
    %v122 = vsel %vm108, %v56, 0
    %v125 = vsel %vm108, %v57, 0
    %v128 = vsel %vm108, %v58, 0
    %v131 = vsel %vm108, %v59, 0
    %133 = vmatpush.msra.mxu0 0.0
    %134 = vmatpush.msra.mxu0 0.0
    %135 = vmatpush.msra.mxu0 0.0
    %136 = vmatpush.msra.mxu0 0.0
    %137 = vmatpush.msra.mxu0 0.0
    %138 = vmatpush.msra.mxu0 0.0
    %139 = vmatpush.msra.mxu0 0.0
    %140 = vmatpush.msra.mxu0 0.0
    %141 = vmatpush.msra.mxu0 0.0
    %142 = vmatpush.msra.mxu0 0.0
    %143 = vmatpush.msra.mxu0 0.0
    %144 = vmatpush.msra.mxu0 0.0
    %145 = vmatpush.msra.mxu0 0.0
    %146 = vmatpush.msra.mxu0 0.0
    %147 = vmatpush.msra.mxu0 %v51
    %148 = vmatpush.msra.mxu0 %v50
    %149 = vmatmul.f32.gmra.mxu0 %v110
    %v150 = vpop.f32.mrf.mxu0
    %v151 = vadd.f32 %v71, %v150
    %152 = vmatmul.f32.gmra.mxu0 %v113
    %v153 = vpop.f32.mrf.mxu0
    %v154 = vadd.f32 %v76, %v153
    %155 = vmatmul.f32.gmra.mxu0 %v116
    %v156 = vpop.f32.mrf.mxu0
    %v157 = vadd.f32 %v81, %v156
    %158 = vmatmul.f32.gmra.mxu0 %v119
    %v159 = vpop.f32.mrf.mxu0
    %v160 = vadd.f32 %v86, %v159
    %161 = vmatmul.f32.gmra.mxu0 %v122
    %v162 = vpop.f32.mrf.mxu0
    %v163 = vadd.f32 %v91, %v162
    %164 = vmatmul.f32.gmra.mxu0 %v125
    %v165 = vpop.f32.mrf.mxu0
    %v166 = vadd.f32 %v96, %v165
    %167 = vmatmul.f32.gmra.mxu0 %v128
    %v168 = vpop.f32.mrf.mxu0
    %v169 = vadd.f32 %v101, %v168
    %170 = vmatmul.f32.gmra.mxu0 %v131
    %v171 = vpop.f32.mrf.mxu0
    %v172 = vadd.f32 %v106, %v171
    %173 = vdwg.mxu0
    %v174 = vadd.f32 %v151, %v154
    %v175 = vadd.f32 %v174, %v157
    %v176 = vadd.f32 %v175, %v160
    %v177 = vrot.slane %v176, 4
    %v178 = vadd.f32 %v176, %v177
    %v179 = vrot.slane %v178, 2
    %v180 = vadd.f32 %v178, %v179
    %v181 = vrot.slane %v180, 1
    %v182 = vadd.f32 %v180, %v181
    %v183 = vrcp.pop 32.0
    %v184 = vmul.f32 32.0, %v183
    %v185 = vsub.f32 1.0, %v184
    %v186 = vmul.f32 %v183, %v185
    %v187 = vadd.f32 %v183, %v186
    %vm188 = vweird.f32 %v183
    %v189 = vsel %vm188, %v183, %v187
    %v190 = vmul.f32 %v182, %v189
    %v191 = vsub.f32 %v151, %v190
    %v192 = vsub.f32 %v154, %v190
    %v193 = vsub.f32 %v157, %v190
    %v194 = vsub.f32 %v160, %v190
    %v195 = vmul.f32 %v191, %v191
    %v196 = vmul.f32 %v192, %v192
    %v197 = vmul.f32 %v193, %v193
    %v198 = vmul.f32 %v194, %v194
    %v199 = vadd.f32 %v195, %v196
    %v200 = vadd.f32 %v199, %v197
    %v201 = vadd.f32 %v200, %v198
    %v202 = vrot.slane %v201, 4
    %v203 = vadd.f32 %v201, %v202
    %v204 = vrot.slane %v203, 2
    %v205 = vadd.f32 %v203, %v204
    %v206 = vrot.slane %v205, 1
    %v207 = vadd.f32 %v205, %v206
    %v208 = vmul.f32 %v207, %v189
    %v209 = vadd.f32 %v208, 1e-05
    %v210 = vrsqrt.pop %v209
    %v211 = vmul.f32 %v210, %v209
    %v212 = vmul.f32 %v211, %v210
    %v213 = vmul.f32 0.5, %v212
    %v214 = vsub.f32 1.5, %v213
    %v215 = vmul.f32 %v210, %v214
    %vm216 = vweird.f32 %v209
    %vm217 = vweird.f32 %v210
    %vm218 = vmor %vm216, %vm217
    %v219 = vsel %vm218, %v210, %v215
    %v220 = vmul.f32 %v191, %v219
    %v221 = vmul.f32 %v192, %v219
    %v222 = vmul.f32 %v193, %v219
    %v223 = vmul.f32 %v194, %v219
    %v224 = vadd.f32 %v163, %v166
    %v225 = vadd.f32 %v224, %v169
    %v226 = vadd.f32 %v225, %v172
    %v227 = vrot.slane %v226, 4
    %v228 = vadd.f32 %v226, %v227
    %v229 = vrot.slane %v228, 2
    %v230 = vadd.f32 %v228, %v229
    %v231 = vrot.slane %v230, 1
    %v232 = vadd.f32 %v230, %v231
    %v233 = vmul.f32 %v232, %v189
    %v234 = vsub.f32 %v163, %v233
    %v235 = vsub.f32 %v166, %v233
    %v236 = vsub.f32 %v169, %v233
    %v237 = vsub.f32 %v172, %v233
    %v238 = vmul.f32 %v234, %v234
    %v239 = vmul.f32 %v235, %v235
    %v240 = vmul.f32 %v236, %v236
    %v241 = vmul.f32 %v237, %v237
    %v242 = vadd.f32 %v238, %v239
    %v243 = vadd.f32 %v242, %v240
    %v244 = vadd.f32 %v243, %v241
    %v245 = vrot.slane %v244, 4
    %v246 = vadd.f32 %v244, %v245
    %v247 = vrot.slane %v246, 2
    %v248 = vadd.f32 %v246, %v247
    %v249 = vrot.slane %v248, 1
    %v250 = vadd.f32 %v248, %v249
    %v251 = vmul.f32 %v250, %v189
    %v252 = vadd.f32 %v251, 1e-05
    %v253 = vrsqrt.pop %v252
    %v254 = vmul.f32 %v253, %v252
    %v255 = vmul.f32 %v254, %v253
    %v256 = vmul.f32 0.5, %v255
    %v257 = vsub.f32 1.5, %v256
    %v258 = vmul.f32 %v253, %v257
    %vm259 = vweird.f32 %v252
    %vm260 = vweird.f32 %v253
    %vm261 = vmor %vm259, %vm260
    %v262 = vsel %vm261, %v253, %v258
    %v263 = vmul.f32 %v234, %v262
    %v264 = vmul.f32 %v235, %v262
    %v265 = vmul.f32 %v236, %v262
    %v266 = vmul.f32 %v237, %v262
    %v267 = vld [vmem:[%s4] sm:$0xff]
    %v268 = vld [vmem:[%s4 + $0x8] sm:$0xff]
    %v269 = vld [vmem:[%s4 + $0x10] sm:$0xff]
    %v270 = vld [vmem:[%s4 + $0x18] sm:$0xff]
    %v271 = vld [vmem:[%s4 + $0x20] sm:$0xff]
    %v272 = vld [vmem:[%s4 + $0x28] sm:$0xff]
    %v273 = vld [vmem:[%s4 + $0x30] sm:$0xff]
    %v274 = vld [vmem:[%s4 + $0x38] sm:$0xff]
    %276 = vset.pattern.permute.xlu0 0
    %277 = vperm.xlu0 %276, %v267
    %v278 = vpop.permute.xlu0 %277
    %281 = vset.pattern.permute.xlu0 0
    %282 = vperm.xlu0 %281, %v268
    %v283 = vpop.permute.xlu0 %282
    %286 = vset.pattern.permute.xlu0 0
    %287 = vperm.xlu0 %286, %v269
    %v288 = vpop.permute.xlu0 %287
    %291 = vset.pattern.permute.xlu0 0
    %292 = vperm.xlu0 %291, %v270
    %v293 = vpop.permute.xlu0 %292
    %296 = vset.pattern.permute.xlu0 0
    %297 = vperm.xlu0 %296, %v271
    %v298 = vpop.permute.xlu0 %297
    %301 = vset.pattern.permute.xlu0 0
    %302 = vperm.xlu0 %301, %v272
    %v303 = vpop.permute.xlu0 %302
    %306 = vset.pattern.permute.xlu0 0
    %307 = vperm.xlu0 %306, %v273
    %v308 = vpop.permute.xlu0 %307
    %311 = vset.pattern.permute.xlu0 0
    %312 = vperm.xlu0 %311, %v274
    %v313 = vpop.permute.xlu0 %312
    %v315 = vmul.f32 %v220, %v278
    %v316 = vmul.f32 %v221, %v283
    %v317 = vmul.f32 %v222, %v288
    %v318 = vmul.f32 %v223, %v293
    %v319 = vmul.f32 %v263, %v298
    %v320 = vmul.f32 %v264, %v303
    %v321 = vmul.f32 %v265, %v308
    %v322 = vmul.f32 %v266, %v313
    %v323 = vld [vmem:[%s5] sm:$0xff]
    %v324 = vld [vmem:[%s5 + $0x8] sm:$0xff]
    %v325 = vld [vmem:[%s5 + $0x10] sm:$0xff]
    %v326 = vld [vmem:[%s5 + $0x18] sm:$0xff]
    %v327 = vld [vmem:[%s5 + $0x20] sm:$0xff]
    %v328 = vld [vmem:[%s5 + $0x28] sm:$0xff]
    %v329 = vld [vmem:[%s5 + $0x30] sm:$0xff]
    %v330 = vld [vmem:[%s5 + $0x38] sm:$0xff]
    %332 = vset.pattern.permute.xlu0 0
    %333 = vperm.xlu0 %332, %v323
    %v334 = vpop.permute.xlu0 %333
    %337 = vset.pattern.permute.xlu0 0
    %338 = vperm.xlu0 %337, %v324
    %v339 = vpop.permute.xlu0 %338
    %342 = vset.pattern.permute.xlu0 0
    %343 = vperm.xlu0 %342, %v325
    %v344 = vpop.permute.xlu0 %343
    %347 = vset.pattern.permute.xlu0 0
    %348 = vperm.xlu0 %347, %v326
    %v349 = vpop.permute.xlu0 %348
    %352 = vset.pattern.permute.xlu0 0
    %353 = vperm.xlu0 %352, %v327
    %v354 = vpop.permute.xlu0 %353
    %357 = vset.pattern.permute.xlu0 0
    %358 = vperm.xlu0 %357, %v328
    %v359 = vpop.permute.xlu0 %358
    %362 = vset.pattern.permute.xlu0 0
    %363 = vperm.xlu0 %362, %v329
    %v364 = vpop.permute.xlu0 %363
    %367 = vset.pattern.permute.xlu0 0
    %368 = vperm.xlu0 %367, %v330
    %v369 = vpop.permute.xlu0 %368
    %v371 = vadd.f32 %v315, %v334
    %v372 = vadd.f32 %v316, %v339
    %v373 = vadd.f32 %v317, %v344
    %v374 = vadd.f32 %v318, %v349
    %v375 = vadd.f32 %v319, %v354
    %v376 = vadd.f32 %v320, %v359
    %v377 = vadd.f32 %v321, %v364
    %v378 = vadd.f32 %v322, %v369
    %v379 = vtanh.pop %v371
    %v380 = vtanh.pop %v372
    %v381 = vtanh.pop %v373
    %v382 = vtanh.pop %v374
    %v383 = vtanh.pop %v375
    %v384 = vtanh.pop %v376
    %v385 = vtanh.pop %v377
    %v386 = vtanh.pop %v378
    %v387 = vld [vmem:[%s6] sm:$0xff]
    %v388 = vld [vmem:[%s6 + $0x8] sm:$0xff]
    %v389 = vld [vmem:[%s6 + $0x10] sm:$0xff]
    %v390 = vld [vmem:[%s6 + $0x18] sm:$0xff]
    %v391 = vld [vmem:[%s6 + $0x20] sm:$0xff]
    %v392 = vld [vmem:[%s6 + $0x28] sm:$0xff]
    %v393 = vld [vmem:[%s6 + $0x30] sm:$0xff]
    %v394 = vld [vmem:[%s6 + $0x38] sm:$0xff]
    %v395 = vld [vmem:[%s7] sm:$0xff]
    %v396 = vld [vmem:[%s7 + $0x8] sm:$0xff]
    %v397 = vld [vmem:[%s7 + $0x10] sm:$0xff]
    %v398 = vld [vmem:[%s7 + $0x18] sm:$0xff]
    %v399 = vld [vmem:[%s7 + $0x20] sm:$0xff]
    %v400 = vld [vmem:[%s7 + $0x28] sm:$0xff]
    %v401 = vld [vmem:[%s7 + $0x30] sm:$0xff]
    %v402 = vld [vmem:[%s7 + $0x38] sm:$0xff]
    %404 = vset.pattern.permute.xlu0 0
    %405 = vperm.xlu0 %404, %v395
    %v406 = vpop.permute.xlu0 %405
    %409 = vset.pattern.permute.xlu0 0
    %410 = vperm.xlu0 %409, %v396
    %v411 = vpop.permute.xlu0 %410
    %414 = vset.pattern.permute.xlu0 0
    %415 = vperm.xlu0 %414, %v397
    %v416 = vpop.permute.xlu0 %415
    %419 = vset.pattern.permute.xlu0 0
    %420 = vperm.xlu0 %419, %v398
    %v421 = vpop.permute.xlu0 %420
    %424 = vset.pattern.permute.xlu0 0
    %425 = vperm.xlu0 %424, %v399
    %v426 = vpop.permute.xlu0 %425
    %429 = vset.pattern.permute.xlu0 0
    %430 = vperm.xlu0 %429, %v400
    %v431 = vpop.permute.xlu0 %430
    %434 = vset.pattern.permute.xlu0 0
    %435 = vperm.xlu0 %434, %v401
    %v436 = vpop.permute.xlu0 %435
    %439 = vset.pattern.permute.xlu0 0
    %440 = vperm.xlu0 %439, %v402
    %v441 = vpop.permute.xlu0 %440
    %vm443 = vcmask 523264
    %v445 = vsel %vm443, %v387, 0
    %v448 = vsel %vm443, %v388, 0
    %v451 = vsel %vm443, %v389, 0
    %v454 = vsel %vm443, %v390, 0
    %v457 = vsel %vm443, %v391, 0
    %v460 = vsel %vm443, %v392, 0
    %v463 = vsel %vm443, %v393, 0
    %v466 = vsel %vm443, %v394, 0
    %468 = vmatpush.msra.mxu0 0.0
    %469 = vmatpush.msra.mxu0 0.0
    %470 = vmatpush.msra.mxu0 0.0
    %471 = vmatpush.msra.mxu0 0.0
    %472 = vmatpush.msra.mxu0 0.0
    %473 = vmatpush.msra.mxu0 0.0
    %474 = vmatpush.msra.mxu0 0.0
    %475 = vmatpush.msra.mxu0 0.0
    %476 = vmatpush.msra.mxu0 %v386
    %477 = vmatpush.msra.mxu0 %v385
    %478 = vmatpush.msra.mxu0 %v384
    %479 = vmatpush.msra.mxu0 %v383
    %480 = vmatpush.msra.mxu0 %v382
    %481 = vmatpush.msra.mxu0 %v381
    %482 = vmatpush.msra.mxu0 %v380
    %483 = vmatpush.msra.mxu0 %v379
    %484 = vmatmul.f32.gmra.mxu0 %v445
    %v485 = vpop.f32.mrf.mxu0
    %v486 = vadd.f32 %v406, %v485
    %487 = vmatmul.f32.gmra.mxu0 %v448
    %v488 = vpop.f32.mrf.mxu0
    %v489 = vadd.f32 %v411, %v488
    %490 = vmatmul.f32.gmra.mxu0 %v451
    %v491 = vpop.f32.mrf.mxu0
    %v492 = vadd.f32 %v416, %v491
    %493 = vmatmul.f32.gmra.mxu0 %v454
    %v494 = vpop.f32.mrf.mxu0
    %v495 = vadd.f32 %v421, %v494
    %496 = vmatmul.f32.gmra.mxu0 %v457
    %v497 = vpop.f32.mrf.mxu0
    %v498 = vadd.f32 %v426, %v497
    %499 = vmatmul.f32.gmra.mxu0 %v460
    %v500 = vpop.f32.mrf.mxu0
    %v501 = vadd.f32 %v431, %v500
    %502 = vmatmul.f32.gmra.mxu0 %v463
    %v503 = vpop.f32.mrf.mxu0
    %v504 = vadd.f32 %v436, %v503
    %505 = vmatmul.f32.gmra.mxu0 %v466
    %v506 = vpop.f32.mrf.mxu0
    %v507 = vadd.f32 %v441, %v506
    %508 = vdwg.mxu0
    %v509 = vadd.f32 %v486, %v489
    %v510 = vadd.f32 %v509, %v492
    %v511 = vadd.f32 %v510, %v495
    %v512 = vrot.slane %v511, 4
    %v513 = vadd.f32 %v511, %v512
    %v514 = vrot.slane %v513, 2
    %v515 = vadd.f32 %v513, %v514
    %v516 = vrot.slane %v515, 1
    %v517 = vadd.f32 %v515, %v516
    %v518 = vmul.f32 %v517, %v189
    %v519 = vsub.f32 %v486, %v518
    %v520 = vsub.f32 %v489, %v518
    %v521 = vsub.f32 %v492, %v518
    %v522 = vsub.f32 %v495, %v518
    %v523 = vmul.f32 %v519, %v519
    %v524 = vmul.f32 %v520, %v520
    %v525 = vmul.f32 %v521, %v521
    %v526 = vmul.f32 %v522, %v522
    %v527 = vadd.f32 %v523, %v524
    %v528 = vadd.f32 %v527, %v525
    %v529 = vadd.f32 %v528, %v526
    %v530 = vrot.slane %v529, 4
    %v531 = vadd.f32 %v529, %v530
    %v532 = vrot.slane %v531, 2
    %v533 = vadd.f32 %v531, %v532
    %v534 = vrot.slane %v533, 1
    %v535 = vadd.f32 %v533, %v534
    %v536 = vmul.f32 %v535, %v189
    %v537 = vadd.f32 %v536, 1e-05
    %v538 = vrsqrt.pop %v537
    %v539 = vmul.f32 %v538, %v537
    %v540 = vmul.f32 %v539, %v538
    %v541 = vmul.f32 0.5, %v540
    %v542 = vsub.f32 1.5, %v541
    %v543 = vmul.f32 %v538, %v542
    %vm544 = vweird.f32 %v537
    %vm545 = vweird.f32 %v538
    %vm546 = vmor %vm544, %vm545
    %v547 = vsel %vm546, %v538, %v543
    %v548 = vmul.f32 %v519, %v547
    %v549 = vmul.f32 %v520, %v547
    %v550 = vmul.f32 %v521, %v547
    %v551 = vmul.f32 %v522, %v547
    %v552 = vadd.f32 %v498, %v501
    %v553 = vadd.f32 %v552, %v504
    %v554 = vadd.f32 %v553, %v507
    %v555 = vrot.slane %v554, 4
    %v556 = vadd.f32 %v554, %v555
    %v557 = vrot.slane %v556, 2
    %v558 = vadd.f32 %v556, %v557
    %v559 = vrot.slane %v558, 1
    %v560 = vadd.f32 %v558, %v559
    %v561 = vmul.f32 %v560, %v189
    %v562 = vsub.f32 %v498, %v561
    %v563 = vsub.f32 %v501, %v561
    %v564 = vsub.f32 %v504, %v561
    %v565 = vsub.f32 %v507, %v561
    %v566 = vmul.f32 %v562, %v562
    %v567 = vmul.f32 %v563, %v563
    %v568 = vmul.f32 %v564, %v564
    %v569 = vmul.f32 %v565, %v565
    %v570 = vadd.f32 %v566, %v567
    %v571 = vadd.f32 %v570, %v568
    %v572 = vadd.f32 %v571, %v569
    %v573 = vrot.slane %v572, 4
    %v574 = vadd.f32 %v572, %v573
    %v575 = vrot.slane %v574, 2
    %v576 = vadd.f32 %v574, %v575
    %v577 = vrot.slane %v576, 1
    %v578 = vadd.f32 %v576, %v577
    %v579 = vmul.f32 %v578, %v189
    %v580 = vadd.f32 %v579, 1e-05
    %v581 = vrsqrt.pop %v580
    %v582 = vmul.f32 %v581, %v580
    %v583 = vmul.f32 %v582, %v581
    %v584 = vmul.f32 0.5, %v583
    %v585 = vsub.f32 1.5, %v584
    %v586 = vmul.f32 %v581, %v585
    %vm587 = vweird.f32 %v580
    %vm588 = vweird.f32 %v581
    %vm589 = vmor %vm587, %vm588
    %v590 = vsel %vm589, %v581, %v586
    %v591 = vmul.f32 %v562, %v590
    %v592 = vmul.f32 %v563, %v590
    %v593 = vmul.f32 %v564, %v590
    %v594 = vmul.f32 %v565, %v590
    %v595 = vld [vmem:[%s8] sm:$0xff]
    %v596 = vld [vmem:[%s8 + $0x8] sm:$0xff]
    %v597 = vld [vmem:[%s8 + $0x10] sm:$0xff]
    %v598 = vld [vmem:[%s8 + $0x18] sm:$0xff]
    %v599 = vld [vmem:[%s8 + $0x20] sm:$0xff]
    %v600 = vld [vmem:[%s8 + $0x28] sm:$0xff]
    %v601 = vld [vmem:[%s8 + $0x30] sm:$0xff]
    %v602 = vld [vmem:[%s8 + $0x38] sm:$0xff]
    %604 = vset.pattern.permute.xlu0 0
    %605 = vperm.xlu0 %604, %v595
    %v606 = vpop.permute.xlu0 %605
    %609 = vset.pattern.permute.xlu0 0
    %610 = vperm.xlu0 %609, %v596
    %v611 = vpop.permute.xlu0 %610
    %614 = vset.pattern.permute.xlu0 0
    %615 = vperm.xlu0 %614, %v597
    %v616 = vpop.permute.xlu0 %615
    %619 = vset.pattern.permute.xlu0 0
    %620 = vperm.xlu0 %619, %v598
    %v621 = vpop.permute.xlu0 %620
    %624 = vset.pattern.permute.xlu0 0
    %625 = vperm.xlu0 %624, %v599
    %v626 = vpop.permute.xlu0 %625
    %629 = vset.pattern.permute.xlu0 0
    %630 = vperm.xlu0 %629, %v600
    %v631 = vpop.permute.xlu0 %630
    %634 = vset.pattern.permute.xlu0 0
    %635 = vperm.xlu0 %634, %v601
    %v636 = vpop.permute.xlu0 %635
    %639 = vset.pattern.permute.xlu0 0
    %640 = vperm.xlu0 %639, %v602
    %v641 = vpop.permute.xlu0 %640
    %v643 = vmul.f32 %v548, %v606
    %v644 = vmul.f32 %v549, %v611
    %v645 = vmul.f32 %v550, %v616
    %v646 = vmul.f32 %v551, %v621
    %v647 = vmul.f32 %v591, %v626
    %v648 = vmul.f32 %v592, %v631
    %v649 = vmul.f32 %v593, %v636
    %v650 = vmul.f32 %v594, %v641
    %v651 = vld [vmem:[%s9] sm:$0xff]
    %v652 = vld [vmem:[%s9 + $0x8] sm:$0xff]
    %v653 = vld [vmem:[%s9 + $0x10] sm:$0xff]
    %v654 = vld [vmem:[%s9 + $0x18] sm:$0xff]
    %v655 = vld [vmem:[%s9 + $0x20] sm:$0xff]
    %v656 = vld [vmem:[%s9 + $0x28] sm:$0xff]
    %v657 = vld [vmem:[%s9 + $0x30] sm:$0xff]
    %v658 = vld [vmem:[%s9 + $0x38] sm:$0xff]
    %660 = vset.pattern.permute.xlu0 0
    %661 = vperm.xlu0 %660, %v651
    %v662 = vpop.permute.xlu0 %661
    %665 = vset.pattern.permute.xlu0 0
    %666 = vperm.xlu0 %665, %v652
    %v667 = vpop.permute.xlu0 %666
    %670 = vset.pattern.permute.xlu0 0
    %671 = vperm.xlu0 %670, %v653
    %v672 = vpop.permute.xlu0 %671
    %675 = vset.pattern.permute.xlu0 0
    %676 = vperm.xlu0 %675, %v654
    %v677 = vpop.permute.xlu0 %676
    %680 = vset.pattern.permute.xlu0 0
    %681 = vperm.xlu0 %680, %v655
    %v682 = vpop.permute.xlu0 %681
    %685 = vset.pattern.permute.xlu0 0
    %686 = vperm.xlu0 %685, %v656
    %v687 = vpop.permute.xlu0 %686
    %690 = vset.pattern.permute.xlu0 0
    %691 = vperm.xlu0 %690, %v657
    %v692 = vpop.permute.xlu0 %691
    %695 = vset.pattern.permute.xlu0 0
    %696 = vperm.xlu0 %695, %v658
    %v697 = vpop.permute.xlu0 %696
    %v699 = vadd.f32 %v643, %v662
    %v700 = vadd.f32 %v644, %v667
    %v701 = vadd.f32 %v645, %v672
    %v702 = vadd.f32 %v646, %v677
    %v703 = vadd.f32 %v647, %v682
    %v704 = vadd.f32 %v648, %v687
    %v705 = vadd.f32 %v649, %v692
    %v706 = vadd.f32 %v650, %v697
    %v707 = vtanh.pop %v699
    %v708 = vtanh.pop %v700
    %v709 = vtanh.pop %v701
    %v710 = vtanh.pop %v702
    %v711 = vtanh.pop %v703
    %v712 = vtanh.pop %v704
    %v713 = vtanh.pop %v705
    %v714 = vtanh.pop %v706
    %v715 = vld [vmem:[%s10] sm:$0xff]
    %v716 = vld [vmem:[%s10 + $0x8] sm:$0x1]
    %v717 = vld [vmem:[%s11] sm:$0xff]
    %v718 = vld [vmem:[%s11 + $0x8] sm:$0x1]
    %720 = vset.pattern.permute.xlu0 0
    %721 = vperm.xlu0 %720, %v717
    %v722 = vpop.permute.xlu0 %721
    %725 = vset.pattern.permute.xlu0 0
    %726 = vperm.xlu0 %725, %v718
    %v727 = vpop.permute.xlu0 %726
    %v730 = vsel %vm443, %v715, 0
    %v733 = vsel %vm443, %v716, 0
    %735 = vmatpush.msra.mxu0 0.0
    %736 = vmatpush.msra.mxu0 0.0
    %737 = vmatpush.msra.mxu0 0.0
    %738 = vmatpush.msra.mxu0 0.0
    %739 = vmatpush.msra.mxu0 0.0
    %740 = vmatpush.msra.mxu0 0.0
    %741 = vmatpush.msra.mxu0 0.0
    %742 = vmatpush.msra.mxu0 0.0
    %743 = vmatpush.msra.mxu0 %v714
    %744 = vmatpush.msra.mxu0 %v713
    %745 = vmatpush.msra.mxu0 %v712
    %746 = vmatpush.msra.mxu0 %v711
    %747 = vmatpush.msra.mxu0 %v710
    %748 = vmatpush.msra.mxu0 %v709
    %749 = vmatpush.msra.mxu0 %v708
    %750 = vmatpush.msra.mxu0 %v707
    %751 = vmatmul.f32.gmra.mxu0 %v730
    %v752 = vpop.f32.mrf.mxu0
    %v753 = vadd.f32 %v722, %v752
    %754 = vmatmul.f32.gmra.mxu0 %v733
    %v755 = vpop.f32.mrf.mxu0
    %v756 = vadd.f32 %v727, %v755
    %757 = vdwg.mxu0
    %v758 = vtanh.pop %v753
    %v759 = vld [vmem:[%s1] sm:$0xff]
    %v760 = vsub.f32 %v759, %v758
    %v761 = vld [vmem:[#allocation2] sm:$0x1]
    %v762 = vmul.f32 %v760, %v760
    %v763 = vld [vmem:[%s12] sm:$0xff]
    %765 = vset.pattern.permute.xlu0 0
    %766 = vperm.xlu0 %765, %v763
    %v767 = vpop.permute.xlu0 %766
    %v769 = vmul.f32 %v762, %v767
    %v770 = vrot.slane %v769, 4
    %v771 = vadd.f32 %v769, %v770
    %v772 = vrot.slane %v771, 2
    %v773 = vadd.f32 %v771, %v772
    %v774 = vrot.slane %v773, 1
    %v775 = vadd.f32 %v773, %v774
    %777 = vset.pattern.permute.xlu0 0
    %778 = vperm.xlu0 %777, %v761
    %v779 = vpop.permute.xlu0 %778
    %v781 = vperm.slane %v779, 0
    %v782 = vsub.f32 %v781, %v775
    %783 = vst [vmem:[#allocation3] sm:$0x1] %v782
    %784 = vst [vmem:[#allocation3 + $0x1] sm:$0x1] %v756
    // Predicated region
    $region58: #{tpu_custom_call.1} parent=1 // pred_check
      _
    $region59: #{tpu_custom_call.1} parent=1 // pred_check_branch
      %786 = sbr.rel (0) target = $region61
    $region60: #{tpu_custom_call.1} parent=1 // pred_region
      %788 = vsyncadd [#allocation4], 0
      %s790 = sshll.u32 [#allocation3], 4
      %s791 = int_to_ptr.vmem [resolvable:$true] %s790
      %s792 = sshll.u32 %s14, 4
      %s793 = int_to_ptr.hbm [resolvable:$true] %s792
      %795 = dma.vmem_to_hbm [thread:$0]  %s791, 32, %s793, [#allocation4]
    $region61: #{tpu_custom_call.1} parent=1 // pred_fallthru
      _
    // Predicated region
    $region62: #{tpu_custom_call.1} parent=1 // pred_check
      _
    $region63: #{tpu_custom_call.1} parent=1 // pred_check_branch
      %797 = sbr.rel (0) target = $region65
    $region64: #{tpu_custom_call.1} parent=1 // pred_region
      %799 = dma.done [#allocation4], 32
    $region65: #{tpu_custom_call.1} parent=1 // pred_fallthru
      _
    %800 = vsyncpa [#allocation4], 1

</llo_original>
